<compile_context>
chip_gen: v7x
topology: tpu7x:2x2x1
jax: 0.10.0
libtpu: 0.0.40
codegen_flags: <defaults>
</compile_context>

<pallas_src>
import numpy as np

import jax
import jax.numpy as jnp
from jax import lax
from jax.experimental import pallas as pl
from jax.experimental.pallas import tpu as pltpu


def _make_kernel(N, G, use_fused):
    """Kernel factory: one grid step reduces up to G groups of the (N, M, D)
    stack into a (1, 1, D) partial penalty sum."""
    static_trip = (N % G == 0)

    def kernel(lb_ref, ub_ref, p_ref, out_ref):
        i = pl.program_id(0)
        _, M, D = p_ref.shape
        base = i * G

        def body(g, acc):
            x = p_ref[g].astype(jnp.float32)            # (M, D)
            lb = lb_ref[base + g]                        # scalar (SMEM)
            ub = ub_ref[base + g]                        # scalar (SMEM)
            if use_fused:
                # Valid when lb <= ub (verified statically in the wrapper).
                pen = jnp.maximum(jnp.maximum(x - ub, lb - x), 0.0)
            else:
                pen = jnp.maximum(x - ub, 0.0) + jnp.maximum(lb - x, 0.0)
            # Sublane reduce (M, D) -> (1, D); handles any M (no padding).
            return acc + jnp.sum(pen, axis=0, keepdims=True)

        acc0 = jnp.zeros((1, D), jnp.float32)
        if static_trip:
            # Static trip count; unroll only when short (LLO visibility).
            acc = lax.fori_loop(0, G, body, acc0, unroll=(G <= 8))
        else:
            # Last block may extend past N: dynamic trip count means the
            # out-of-range (undefined) rows of the block are never touched.
            n_valid = jnp.minimum(G, N - base)
            acc = lax.fori_loop(0, n_valid, body, acc0)

        out_ref[...] = acc.reshape(1, 1, D)

    return kernel


def range_bound_loss(params_stack, lb, ub, factor):
    """params_stack: (N, M, D) float32/bfloat16; lb, ub: length-N bounds;
    factor: scalar.  Mirrors RangeBoundLoss.forward for N equally-shaped
    parameter groups."""
    params_stack = jnp.asarray(params_stack)
    N, M, D = params_stack.shape
    lb_arr = jnp.asarray(lb, dtype=jnp.float32).reshape(N)
    ub_arr = jnp.asarray(ub, dtype=jnp.float32).reshape(N)

    # The fused-max penalty saves one VALU op/element but requires lb <= ub.
    # Verify statically when the bounds are concrete; otherwise keep the
    # exact two-relu formulation.
    try:
        use_fused = bool(np.all(np.asarray(lb, dtype=np.float32)
                                <= np.asarray(ub, dtype=np.float32)))
    except Exception:
        use_fused = False

    # Groups per grid step: target ~8 MiB of VMEM-padded input per block so
    # HBM streaming stays near roofline and per-step overhead is amortized.
    itemsize = jnp.dtype(params_stack.dtype).itemsize
    sub_mult = max(8, 32 // itemsize)                     # f32 -> 8, bf16 -> 16
    group_vmem_bytes = (pl.cdiv(M, sub_mult) * sub_mult
                        * pl.cdiv(D, 128) * 128 * itemsize)
    target_block_bytes = 8 * 1024 * 1024
    G = max(1, min(N, target_block_bytes // max(group_vmem_bytes, 1)))
    # v7x has 2 TensorCores: keep >= 2 parallel grid steps for non-tiny inputs.
    if N >= 2 and N * group_vmem_bytes > (2 * 1024 * 1024):
        G = max(1, min(G, pl.cdiv(N, 2)))
    num_chunks = pl.cdiv(N, G)

    block_bytes = G * group_vmem_bytes
    vmem_limit = int(min(48 * 1024 * 1024,
                         max(32 * 1024 * 1024, 2 * block_bytes + 4 * 1024 * 1024)))

    kernel = _make_kernel(N, G, use_fused)

    partials = pl.pallas_call(
        kernel,
        out_shape=jax.ShapeDtypeStruct((num_chunks, 1, D), jnp.float32),
        grid=(num_chunks,),
        in_specs=[
            pl.BlockSpec(memory_space=pltpu.MemorySpace.SMEM),    # lb (N,)
            pl.BlockSpec(memory_space=pltpu.MemorySpace.SMEM),    # ub (N,)
            # Full-extent M, D dims -> no (8,128) padding, no wrapper copy.
            pl.BlockSpec((G, M, D), lambda i: (i, 0, 0)),
        ],
        out_specs=pl.BlockSpec((1, 1, D), lambda i: (i, 0, 0)),
        compiler_params=pltpu.CompilerParams(
            dimension_semantics=("parallel",),     # independent steps: both TCs on v7x
            vmem_limit_bytes=vmem_limit,
        ),
    )(lb_arr, ub_arr, params_stack)

    # Tiny final reduce; fold factor and the per-group mean's 1/(M*D) here.
    scale = jnp.float32(factor) / jnp.float32(M * D)
    return scale * jnp.sum(partials)


def range_bound_loss_ref(params_stack, lb, ub, factor):
    lb = jnp.asarray(lb, dtype=jnp.float32)
    ub = jnp.asarray(ub, dtype=jnp.float32)
    loss = jnp.float32(0.0)
    for i in range(params_stack.shape[0]):
        x = params_stack[i].astype(jnp.float32)
        loss = loss + factor * jnp.mean(jax.nn.relu(x - ub[i]))
        loss = loss + factor * jnp.mean(jax.nn.relu(lb[i] - x))
    return loss


if __name__ == "__main__":
    key = jax.random.PRNGKey(0)

    # Small synthetic setup: N=4 parameter groups, each of shape (16, 256).
    N, M, D = 4, 16, 256
    lb = [0.1, 0.2, 0.3, 0.4]
    ub = [0.9, 0.8, 0.7, 0.6]
    factor = 1.5

    params_stack = jax.random.uniform(
        key, (N, M, D), dtype=jnp.float32, minval=-0.5, maxval=1.5)

    loss = range_bound_loss(params_stack, lb, ub, factor)
    loss = jax.block_until_ready(loss)

    ref = range_bound_loss_ref(params_stack, lb, ub, factor)
    assert jnp.allclose(loss, ref, rtol=1e-5, atol=1e-6), (loss, ref)

    print("KERNEL_OK")
</pallas_src>

<mosaic_0001>
module attributes {stable_mosaic.version = 11 : i64} {
  func.func @kernel(%arg0: i32, %arg1: memref<4xf32, #tpu.memory_space<smem>>, %arg2: memref<4xf32, #tpu.memory_space<smem>>, %arg3: memref<4x16x256xf32, #tpu.memory_space<vmem>>, %arg4: memref<1x1x256xf32, #tpu.memory_space<vmem>>) attributes {dimension_semantics = [#tpu.dimension_semantics<parallel>], iteration_bounds = array<i64: 1>, scalar_prefetch = 0 : i64, scratch_operands = 0 : i64, tpu.core_type = #tpu.core_type<tc>, window_params = [{transform_indices = @transform_0, window_bounds = array<i64: 4>}, {transform_indices = @transform_1, window_bounds = array<i64: 4>}, {transform_indices = @transform_2, window_bounds = array<i64: 4, 16, 256>}, {transform_indices = @transform_3, window_bounds = array<i64: 1, 1, 256>}]} {
    %c4_i32 = arith.constant 4 : i32
    %0 = arith.muli %arg0, %c4_i32 : i32
    %cst = arith.constant 0.000000e+00 : f32
    %1 = vector.broadcast %cst : f32 to vector<1x256xf32>
    %c0_i32 = arith.constant 0 : i32
    %2 = arith.index_cast %c0_i32 : i32 to index
    %c0 = arith.constant 0 : index
    %c0_0 = arith.constant 0 : index
    %3 = vector.load %arg3[%2, %c0, %c0_0] : memref<4x16x256xf32, #tpu.memory_space<vmem>>, vector<1x16x256xf32>
    %4 = vector.shape_cast %3 : vector<1x16x256xf32> to vector<16x256xf32>
    %5 = arith.addi %0, %c0_i32 : i32
    %6 = arith.index_cast %5 : i32 to index
    %7 = memref.load %arg1[%6] : memref<4xf32, #tpu.memory_space<smem>>
    %8 = arith.addi %0, %c0_i32 : i32
    %9 = arith.index_cast %8 : i32 to index
    %10 = memref.load %arg2[%9] : memref<4xf32, #tpu.memory_space<smem>>
    %11 = vector.broadcast %10 : f32 to vector<16x256xf32>
    %12 = arith.subf %4, %11 : vector<16x256xf32>
    %13 = vector.broadcast %7 : f32 to vector<16x256xf32>
    %14 = arith.subf %13, %4 : vector<16x256xf32>
    %15 = arith.maximumf %12, %14 : vector<16x256xf32>
    %cst_1 = arith.constant 0.000000e+00 : f32
    %16 = vector.broadcast %cst_1 : f32 to vector<16x256xf32>
    %17 = arith.maximumf %15, %16 : vector<16x256xf32>
    %cst_2 = arith.constant dense<0.000000e+00> : vector<256xf32>
    %18 = vector.multi_reduction <add>, %17, %cst_2 [0] : vector<16x256xf32> to vector<256xf32>
    %19 = vector.shape_cast %18 : vector<256xf32> to vector<1x256xf32>
    %20 = arith.addf %1, %19 : vector<1x256xf32>
    %c1_i32 = arith.constant 1 : i32
    %21 = arith.index_cast %c1_i32 : i32 to index
    %c0_3 = arith.constant 0 : index
    %c0_4 = arith.constant 0 : index
    %22 = vector.load %arg3[%21, %c0_3, %c0_4] : memref<4x16x256xf32, #tpu.memory_space<vmem>>, vector<1x16x256xf32>
    %23 = vector.shape_cast %22 : vector<1x16x256xf32> to vector<16x256xf32>
    %24 = arith.addi %0, %c1_i32 : i32
    %25 = arith.index_cast %24 : i32 to index
    %26 = memref.load %arg1[%25] : memref<4xf32, #tpu.memory_space<smem>>
    %27 = arith.addi %0, %c1_i32 : i32
    %28 = arith.index_cast %27 : i32 to index
    %29 = memref.load %arg2[%28] : memref<4xf32, #tpu.memory_space<smem>>
    %30 = vector.broadcast %29 : f32 to vector<16x256xf32>
    %31 = arith.subf %23, %30 : vector<16x256xf32>
    %32 = vector.broadcast %26 : f32 to vector<16x256xf32>
    %33 = arith.subf %32, %23 : vector<16x256xf32>
    %34 = arith.maximumf %31, %33 : vector<16x256xf32>
    %cst_5 = arith.constant 0.000000e+00 : f32
    %35 = vector.broadcast %cst_5 : f32 to vector<16x256xf32>
    %36 = arith.maximumf %34, %35 : vector<16x256xf32>
    %cst_6 = arith.constant dense<0.000000e+00> : vector<256xf32>
    %37 = vector.multi_reduction <add>, %36, %cst_6 [0] : vector<16x256xf32> to vector<256xf32>
    %38 = vector.shape_cast %37 : vector<256xf32> to vector<1x256xf32>
    %39 = arith.addf %20, %38 : vector<1x256xf32>
    %c2_i32 = arith.constant 2 : i32
    %40 = arith.index_cast %c2_i32 : i32 to index
    %c0_7 = arith.constant 0 : index
    %c0_8 = arith.constant 0 : index
    %41 = vector.load %arg3[%40, %c0_7, %c0_8] : memref<4x16x256xf32, #tpu.memory_space<vmem>>, vector<1x16x256xf32>
    %42 = vector.shape_cast %41 : vector<1x16x256xf32> to vector<16x256xf32>
    %43 = arith.addi %0, %c2_i32 : i32
    %44 = arith.index_cast %43 : i32 to index
    %45 = memref.load %arg1[%44] : memref<4xf32, #tpu.memory_space<smem>>
    %46 = arith.addi %0, %c2_i32 : i32
    %47 = arith.index_cast %46 : i32 to index
    %48 = memref.load %arg2[%47] : memref<4xf32, #tpu.memory_space<smem>>
    %49 = vector.broadcast %48 : f32 to vector<16x256xf32>
    %50 = arith.subf %42, %49 : vector<16x256xf32>
    %51 = vector.broadcast %45 : f32 to vector<16x256xf32>
    %52 = arith.subf %51, %42 : vector<16x256xf32>
    %53 = arith.maximumf %50, %52 : vector<16x256xf32>
    %cst_9 = arith.constant 0.000000e+00 : f32
    %54 = vector.broadcast %cst_9 : f32 to vector<16x256xf32>
    %55 = arith.maximumf %53, %54 : vector<16x256xf32>
    %cst_10 = arith.constant dense<0.000000e+00> : vector<256xf32>
    %56 = vector.multi_reduction <add>, %55, %cst_10 [0] : vector<16x256xf32> to vector<256xf32>
    %57 = vector.shape_cast %56 : vector<256xf32> to vector<1x256xf32>
    %58 = arith.addf %39, %57 : vector<1x256xf32>
    %c3_i32 = arith.constant 3 : i32
    %59 = arith.index_cast %c3_i32 : i32 to index
    %c0_11 = arith.constant 0 : index
    %c0_12 = arith.constant 0 : index
    %60 = vector.load %arg3[%59, %c0_11, %c0_12] : memref<4x16x256xf32, #tpu.memory_space<vmem>>, vector<1x16x256xf32>
    %61 = vector.shape_cast %60 : vector<1x16x256xf32> to vector<16x256xf32>
    %62 = arith.addi %0, %c3_i32 : i32
    %63 = arith.index_cast %62 : i32 to index
    %64 = memref.load %arg1[%63] : memref<4xf32, #tpu.memory_space<smem>>
    %65 = arith.addi %0, %c3_i32 : i32
    %66 = arith.index_cast %65 : i32 to index
    %67 = memref.load %arg2[%66] : memref<4xf32, #tpu.memory_space<smem>>
    %68 = vector.broadcast %67 : f32 to vector<16x256xf32>
    %69 = arith.subf %61, %68 : vector<16x256xf32>
    %70 = vector.broadcast %64 : f32 to vector<16x256xf32>
    %71 = arith.subf %70, %61 : vector<16x256xf32>
    %72 = arith.maximumf %69, %71 : vector<16x256xf32>
    %cst_13 = arith.constant 0.000000e+00 : f32
    %73 = vector.broadcast %cst_13 : f32 to vector<16x256xf32>
    %74 = arith.maximumf %72, %73 : vector<16x256xf32>
    %cst_14 = arith.constant dense<0.000000e+00> : vector<256xf32>
    %75 = vector.multi_reduction <add>, %74, %cst_14 [0] : vector<16x256xf32> to vector<256xf32>
    %76 = vector.shape_cast %75 : vector<256xf32> to vector<1x256xf32>
    %77 = arith.addf %58, %76 : vector<1x256xf32>
    %c4_i32_15 = arith.constant 4 : i32
    %78 = vector.shape_cast %77 : vector<1x256xf32> to vector<1x1x256xf32>
    %c0_16 = arith.constant 0 : index
    %c0_17 = arith.constant 0 : index
    %c0_18 = arith.constant 0 : index
    %79 = vector.load %arg4[%c0_16, %c0_17, %c0_18] : memref<1x1x256xf32, #tpu.memory_space<vmem>>, vector<1x1x256xf32>
    tpu.vector_store %arg4[%c0_16, %c0_17, %c0_18], %78 {strides = array<i32>} : memref<1x1x256xf32, #tpu.memory_space<vmem>>, vector<1x1x256xf32>,
    return
  }
  func.func @transform_0(%arg0: i32) -> i32 {
    %c0_i32 = arith.constant 0 : i32
    %c0_i32_0 = arith.constant 0 : i32
    return %c0_i32 : i32
  }
  func.func @transform_1(%arg0: i32) -> i32 {
    %c0_i32 = arith.constant 0 : i32
    %c0_i32_0 = arith.constant 0 : i32
    return %c0_i32 : i32
  }
  func.func @transform_2(%arg0: i32) -> (i32, i32, i32) {
    %c0_i32 = arith.constant 0 : i32
    %c0_i32_0 = arith.constant 0 : i32
    %c0_i32_1 = arith.constant 0 : i32
    return %arg0, %c0_i32, %c0_i32_0 : i32, i32, i32
  }
  func.func @transform_3(%arg0: i32) -> (i32, i32, i32) {
    %c0_i32 = arith.constant 0 : i32
    %c0_i32_0 = arith.constant 0 : i32
    %c0_i32_1 = arith.constant 0 : i32
    return %arg0, %c0_i32, %c0_i32_0 : i32, i32, i32
  }
}

</mosaic_0001>

<llo_original>
// kernel: tpu_custom_call.1
$region0: #{tpu_custom_call.1}
  #allocation0 [shape = 'u32[]', space=smem, size = 0x4, offset = 0x4, fixed_abs, tag = 'smem constant byte address 0x4 - core index']
  #allocation1 [shape = 'u32[144,128]{1,0:T(1,128)}', space=vmem, size = 0x12000, scoped, tag = 'internal scratch']
  %s0 = inlined_call_operand.hbm [shape: f32[4], index: 0, kind: input, shape index: {}]
  %s1 = inlined_call_operand.vmem [shape: f32[4], index: 1, kind: input, shape index: {}]
  %s2 = inlined_call_operand.hbm [shape: f32[4,16,256], index: 2, kind: input, shape index: {}]
  %s3 = inlined_call_operand.hbm [shape: f32[1,1,256], index: 3, kind: output, shape index: {}]
  %s4 = sld [smem:[#allocation0]]
  $region34: #{tpu_custom_call.1} parent=0
    _
  %s6 = ssub.s32 1, %s4
  %s7 = scalar_select 0, %s6, %s4
  $region1: #{tpu_custom_call.1} parent=0
    #allocation2 [shape = 'u8[512]{0}', space=smem, size = 0x200, scoped, tag = 'input window, operand 0, single buffered']
    #allocation3 [shape = 's32[1]{0}', space=sflag, size = 0x4, scoped, tag = 'scoped memory for tpu_custom_call.1']
    #allocation4 [shape = 's32[1]{0}', space=sflag, size = 0x4, scoped, tag = 'scoped memory for tpu_custom_call.1']
    #allocation5 [shape = 's32[1]{0}', space=sflag, size = 0x4, scoped, tag = 'scoped memory for tpu_custom_call.1']
    #allocation6 [shape = 's32[1]{0}', space=sflag, size = 0x4, scoped, tag = 'scoped memory for tpu_custom_call.1']
    #allocation7 [shape = 'u8[512]{0}', space=smem, size = 0x200, scoped, tag = 'input window, operand 1, single buffered']
    #allocation8 [shape = 'u8[65536]{0}', space=vmem, size = 0x10000, scoped, tag = 'input window, operand 2, single buffered']
    #allocation9 [shape = 'u8[1024]{0}', space=vmem, size = 0x400, scoped, tag = 'output window, operand 0, single buffered']
    %8 = vsyncpa [#allocation5], 0
    %9 = vsyncpa [#allocation6], 0
    %10 = vsyncpa [#allocation3], 0
    %11 = vsyncpa [#allocation4], 0
    // Predicated region
    $region2: #{tpu_custom_call.1} parent=1 // pred_check
      _
    $region3: #{tpu_custom_call.1} parent=1 // pred_check_branch
      %13 = sbr.rel (0) target = $region5
    $region4: #{tpu_custom_call.1} parent=1 // pred_region
      %s15 = ssub.s32 16, 16
      %16 = vsyncadd [#allocation5], %s15
      %19 = dma.hbm_to_smem %s0, 16, [#allocation2], [#allocation5]
    $region5: #{tpu_custom_call.1} parent=1 // pred_fallthru
      _
    // Predicated region
    $region6: #{tpu_custom_call.1} parent=1 // pred_check
      _
    $region7: #{tpu_custom_call.1} parent=1 // pred_check_branch
      %21 = sbr.rel (0) target = $region9
    $region8: #{tpu_custom_call.1} parent=1 // pred_region
      %s23 = ssub.s32 16, 16
      %24 = vsyncadd [#allocation6], %s23
      %s26 = sshll.u32 %s1, 4
      %s27 = int_to_ptr.vmem [resolvable:$true] %s26
      %29 = dma.vmem_to_smem %s27, 16, [#allocation7], [#allocation6]
    $region9: #{tpu_custom_call.1} parent=1 // pred_fallthru
      _
    // Predicated region
    $region10: #{tpu_custom_call.1} parent=1 // pred_check
      _
    $region11: #{tpu_custom_call.1} parent=1 // pred_check_branch
      %31 = sbr.rel (0) target = $region13
    $region12: #{tpu_custom_call.1} parent=1 // pred_region
      %s33 = ssub.s32 2048, 2048
      %34 = vsyncadd [#allocation3], %s33
      %s35 = sshll.u32 [#allocation8], 4
      %s36 = int_to_ptr.vmem [resolvable:$true] %s35
      %41 = dma.hbm_to_vmem [thread:$0]  %s2, 2048, %s36, [#allocation3], 256, 256, 16
    $region13: #{tpu_custom_call.1} parent=1 // pred_fallthru
      _
    // Predicated region
    $region14: #{tpu_custom_call.1} parent=1 // pred_check
      _
    $region15: #{tpu_custom_call.1} parent=1 // pred_check_branch
      %43 = sbr.rel (0) target = $region17
    $region16: #{tpu_custom_call.1} parent=1 // pred_region
      %44 = dma.done [#allocation5], 16
    $region17: #{tpu_custom_call.1} parent=1 // pred_fallthru
      _
    // Predicated region
    $region18: #{tpu_custom_call.1} parent=1 // pred_check
      _
    $region19: #{tpu_custom_call.1} parent=1 // pred_check_branch
      %46 = sbr.rel (0) target = $region21
    $region20: #{tpu_custom_call.1} parent=1 // pred_region
      %47 = dma.done [#allocation6], 16
    $region21: #{tpu_custom_call.1} parent=1 // pred_fallthru
      _
    // Predicated region
    $region22: #{tpu_custom_call.1} parent=1 // pred_check
      _
    $region23: #{tpu_custom_call.1} parent=1 // pred_check_branch
      %49 = sbr.rel (0) target = $region25
    $region24: #{tpu_custom_call.1} parent=1 // pred_region
      %50 = dma.done [#allocation3], 2048
    $region25: #{tpu_custom_call.1} parent=1 // pred_fallthru
      _
    %51 = sfence
    %s52 = smul.u32 0, 4
    %v53 = vld [vmem:[#allocation8] sm:$0xff]
    %v54 = vld [vmem:[#allocation8 + $0x8] sm:$0xff]
    %v55 = vld [vmem:[#allocation8 + $0x10] sm:$0xff]
    %v56 = vld [vmem:[#allocation8 + $0x18] sm:$0xff]
    %s57 = sld [smem:[#allocation2 + %s52]]
    %s58 = sld [smem:[#allocation7 + %s52]]
    %v59 = vstv %s58
    %v60 = vsub.f32 %v53, %v59
    %v61 = vsub.f32 %v54, %v59
    %v62 = vsub.f32 %v55, %v59
    %v63 = vsub.f32 %v56, %v59
    %v64 = vstv %s57
    %v65 = vsub.f32 %v64, %v53
    %v66 = vsub.f32 %v64, %v54
    %v67 = vsub.f32 %v64, %v55
    %v68 = vsub.f32 %v64, %v56
    %v69 = vmax.f32 %v60, %v65
    %v70 = vmax.f32 %v61, %v66
    %v71 = vmax.f32 %v62, %v67
    %v72 = vmax.f32 %v63, %v68
    %v73 = vmax.f32 %v69, 0.0
    %v74 = vmax.f32 %v70, 0.0
    %v75 = vmax.f32 %v71, 0.0
    %v76 = vmax.f32 %v72, 0.0
    %v77 = vadd.f32 %v73, %v75
    %v78 = vrot.slane %v77, 4
    %v79 = vadd.f32 %v77, %v78
    %v80 = vrot.slane %v79, 2
    %v81 = vadd.f32 %v79, %v80
    %v82 = vrot.slane %v81, 1
    %v83 = vadd.f32 %v81, %v82
    %v84 = vadd.f32 %v74, %v76
    %v85 = vrot.slane %v84, 4
    %v86 = vadd.f32 %v84, %v85
    %v87 = vrot.slane %v86, 2
    %v88 = vadd.f32 %v86, %v87
    %v89 = vrot.slane %v88, 1
    %v90 = vadd.f32 %v88, %v89
    %v91 = vadd.f32 %v83, 0.0
    %v92 = vadd.f32 %v90, 0.0
    %s93 = scalar_lea.vmem [#allocation8], 32
    %v94 = vld [vmem:[%s93] sm:$0xff]
    %v95 = vld [vmem:[%s93 + $0x8] sm:$0xff]
    %v96 = vld [vmem:[%s93 + $0x10] sm:$0xff]
    %v97 = vld [vmem:[%s93 + $0x18] sm:$0xff]
    %s98 = sadd.s32 %s52, 1
    %s99 = sld [smem:[#allocation2 + %s98]]
    %s100 = sld [smem:[#allocation7 + %s98]]
    %v101 = vstv %s100
    %v102 = vsub.f32 %v94, %v101
    %v103 = vsub.f32 %v95, %v101
    %v104 = vsub.f32 %v96, %v101
    %v105 = vsub.f32 %v97, %v101
    %v106 = vstv %s99
    %v107 = vsub.f32 %v106, %v94
    %v108 = vsub.f32 %v106, %v95
    %v109 = vsub.f32 %v106, %v96
    %v110 = vsub.f32 %v106, %v97
    %v111 = vmax.f32 %v102, %v107
    %v112 = vmax.f32 %v103, %v108
    %v113 = vmax.f32 %v104, %v109
    %v114 = vmax.f32 %v105, %v110
    %v115 = vmax.f32 %v111, 0.0
    %v116 = vmax.f32 %v112, 0.0
    %v117 = vmax.f32 %v113, 0.0
    %v118 = vmax.f32 %v114, 0.0
    %v119 = vadd.f32 %v115, %v117
    %v120 = vrot.slane %v119, 4
    %v121 = vadd.f32 %v119, %v120
    %v122 = vrot.slane %v121, 2
    %v123 = vadd.f32 %v121, %v122
    %v124 = vrot.slane %v123, 1
    %v125 = vadd.f32 %v123, %v124
    %v126 = vadd.f32 %v116, %v118
    %v127 = vrot.slane %v126, 4
    %v128 = vadd.f32 %v126, %v127
    %v129 = vrot.slane %v128, 2
    %v130 = vadd.f32 %v128, %v129
    %v131 = vrot.slane %v130, 1
    %v132 = vadd.f32 %v130, %v131
    %v133 = vadd.f32 %v91, %v125
    %v134 = vadd.f32 %v92, %v132
    %s135 = scalar_lea.vmem [#allocation8], 64
    %v136 = vld [vmem:[%s135] sm:$0xff]
    %v137 = vld [vmem:[%s135 + $0x8] sm:$0xff]
    %v138 = vld [vmem:[%s135 + $0x10] sm:$0xff]
    %v139 = vld [vmem:[%s135 + $0x18] sm:$0xff]
    %s140 = sadd.s32 %s52, 2
    %s141 = sld [smem:[#allocation2 + %s140]]
    %s142 = sld [smem:[#allocation7 + %s140]]
    %v143 = vstv %s142
    %v144 = vsub.f32 %v136, %v143
    %v145 = vsub.f32 %v137, %v143
    %v146 = vsub.f32 %v138, %v143
    %v147 = vsub.f32 %v139, %v143
    %v148 = vstv %s141
    %v149 = vsub.f32 %v148, %v136
    %v150 = vsub.f32 %v148, %v137
    %v151 = vsub.f32 %v148, %v138
    %v152 = vsub.f32 %v148, %v139
    %v153 = vmax.f32 %v144, %v149
    %v154 = vmax.f32 %v145, %v150
    %v155 = vmax.f32 %v146, %v151
    %v156 = vmax.f32 %v147, %v152
    %v157 = vmax.f32 %v153, 0.0
    %v158 = vmax.f32 %v154, 0.0
    %v159 = vmax.f32 %v155, 0.0
    %v160 = vmax.f32 %v156, 0.0
    %v161 = vadd.f32 %v157, %v159
    %v162 = vrot.slane %v161, 4
    %v163 = vadd.f32 %v161, %v162
    %v164 = vrot.slane %v163, 2
    %v165 = vadd.f32 %v163, %v164
    %v166 = vrot.slane %v165, 1
    %v167 = vadd.f32 %v165, %v166
    %v168 = vadd.f32 %v158, %v160
    %v169 = vrot.slane %v168, 4
    %v170 = vadd.f32 %v168, %v169
    %v171 = vrot.slane %v170, 2
    %v172 = vadd.f32 %v170, %v171
    %v173 = vrot.slane %v172, 1
    %v174 = vadd.f32 %v172, %v173
    %v175 = vadd.f32 %v133, %v167
    %v176 = vadd.f32 %v134, %v174
    %s177 = scalar_lea.vmem [#allocation8], 96
    %v178 = vld [vmem:[%s177] sm:$0xff]
    %v179 = vld [vmem:[%s177 + $0x8] sm:$0xff]
    %v180 = vld [vmem:[%s177 + $0x10] sm:$0xff]
    %v181 = vld [vmem:[%s177 + $0x18] sm:$0xff]
    %s182 = sadd.s32 %s52, 3
    %s183 = sld [smem:[#allocation2 + %s182]]
    %s184 = sld [smem:[#allocation7 + %s182]]
    %v185 = vstv %s184
    %v186 = vsub.f32 %v178, %v185
    %v187 = vsub.f32 %v179, %v185
    %v188 = vsub.f32 %v180, %v185
    %v189 = vsub.f32 %v181, %v185
    %v190 = vstv %s183
    %v191 = vsub.f32 %v190, %v178
    %v192 = vsub.f32 %v190, %v179
    %v193 = vsub.f32 %v190, %v180
    %v194 = vsub.f32 %v190, %v181
    %v195 = vmax.f32 %v186, %v191
    %v196 = vmax.f32 %v187, %v192
    %v197 = vmax.f32 %v188, %v193
    %v198 = vmax.f32 %v189, %v194
    %v199 = vmax.f32 %v195, 0.0
    %v200 = vmax.f32 %v196, 0.0
    %v201 = vmax.f32 %v197, 0.0
    %v202 = vmax.f32 %v198, 0.0
    %v203 = vadd.f32 %v199, %v201
    %v204 = vrot.slane %v203, 4
    %v205 = vadd.f32 %v203, %v204
    %v206 = vrot.slane %v205, 2
    %v207 = vadd.f32 %v205, %v206
    %v208 = vrot.slane %v207, 1
    %v209 = vadd.f32 %v207, %v208
    %v210 = vadd.f32 %v200, %v202
    %v211 = vrot.slane %v210, 4
    %v212 = vadd.f32 %v210, %v211
    %v213 = vrot.slane %v212, 2
    %v214 = vadd.f32 %v212, %v213
    %v215 = vrot.slane %v214, 1
    %v216 = vadd.f32 %v214, %v215
    %v217 = vadd.f32 %v175, %v209
    %v218 = vadd.f32 %v176, %v216
    %v221 = vcombine.low %v217, %v218
    %v223 = vunpack.c.l.s4 1966171168
    %v224 = vunpack.c.0.s8 %v223
    %v225 = vlaneseq
    %v226 = vshrl.u32 %v225, 7
    %v227 = vsub.s32 %v224, %v226
    %v228 = vrot.slane %v221, %v227
    %v230 = vunpack.c.l.s4 1966171168
    %v231 = vunpack.c.0.s8 %v230
    %v232 = vlaneseq
    %v233 = vshrl.u32 %v232, 7
    %v234 = vsub.s32 %v231, %v233
    %v235 = vrot.slane %v228, %v234
    %v237 = vlaneseq
    %vm238 = vcmp.ge.s32.totalorder %v237, 0
    %vm239 = vcmp.lt.s32.totalorder %v237, 256
    %vm240 = vmand %vm238, %vm239
    %241 = vst.msk [vmem:[#allocation9] sm:$0x3] %vm240, %v235
    // Predicated region
    $region26: #{tpu_custom_call.1} parent=1 // pred_check
      _
    $region27: #{tpu_custom_call.1} parent=1 // pred_check_branch
      %243 = sbr.rel (0) target = $region29
    $region28: #{tpu_custom_call.1} parent=1 // pred_region
      %s245 = ssub.s32 32, 32
      %246 = vsyncadd [#allocation4], %s245
      %s248 = sshll.u32 [#allocation9], 4
      %s249 = int_to_ptr.vmem [resolvable:$true] %s248
      %251 = dma.vmem_to_hbm [thread:$0]  %s249, 32, %s3, [#allocation4]
    $region29: #{tpu_custom_call.1} parent=1 // pred_fallthru
      _
    // Predicated region
    $region30: #{tpu_custom_call.1} parent=1 // pred_check
      _
    $region31: #{tpu_custom_call.1} parent=1 // pred_check_branch
      %253 = sbr.rel (0) target = $region33
    $region32: #{tpu_custom_call.1} parent=1 // pred_region
      %254 = dma.done [#allocation4], 32
    $region33: #{tpu_custom_call.1} parent=1 // pred_fallthru
      _
    %255 = vsyncpa [#allocation3], 1
    %256 = vsyncpa [#allocation4], 1
    %257 = vsyncpa [#allocation5], 1
    %258 = vsyncpa [#allocation6], 1

</llo_original>
